<compile_context>
chip_gen: v5e
topology: v5e:2x2
jax: 0.10.0
libtpu: 0.0.40
codegen_flags: <defaults>
</compile_context>

<pallas_src>
import functools

import jax
import jax.numpy as jnp
from jax.experimental import pallas as pl
from jax.experimental.pallas import tpu as pltpu

MIN_NORM = 1e-15  # geoopt's clamp floor


def _arsinh(z):
    # geoopt.Arsinh: log(clamp_min(z + sqrt(1 + z^2), MIN_NORM)).
    # NOTE: sign(z)*log(|z| + sqrt(1+z^2)) would be numerically safer for large
    # negative z, but we keep geoopt's exact formulation for parity.
    return jnp.log(jnp.maximum(z + jnp.sqrt(1.0 + z * z), MIN_NORM))


# ---------------------------------------------------------------------------
# Kernel
# ---------------------------------------------------------------------------
def _dist2plane_kernel(x_ref, cy2_ref, pt_ref, pvec_ref, o_ref, *, two_c, inv_sqrt_c):
    # x_ref:    (TB, D)  matmul dtype (pre-cast in the wrapper)
    # cy2_ref:  (TB, 1)  f32  c*||x||^2         (hoisted out of the kernel)
    # pt_ref:   (D, TP)  matmul dtype, points^T (inner-loop invariant block)
    # pvec_ref: (8, TP)  f32 per-plane constants (hoisted):
    #   row0: c*||p||^2          row1: beta^2            row2: 2*c*beta
    #   row3: 2*sqrt(c)*||p||^2/||p||   row4: 2*sqrt(c)*beta/||p||   row5: bias
    #   (beta = 1 - c*||p||^2)
    # o_ref:    (TB, TP)
    s = jnp.dot(x_ref[...], pt_ref[...], preferred_element_type=jnp.float32)

    cy2 = cy2_ref[...]                       # (TB, 1)
    cx2 = pvec_ref[0:1, :]                   # (1, TP)
    beta2 = pvec_ref[1:2, :]
    two_c_beta = pvec_ref[2:3, :]
    nx = pvec_ref[3:4, :]
    nb = pvec_ref[4:5, :]
    bias = pvec_ref[5:6, :]

    # mobius_add(-p, x) distance-to-hyperplane epilogue, algebraically
    # rearranged so only one reciprocal (EUP, approx) is needed:
    #   ratio = 2*sqrt(c)*(beta*s - alpha*x2)*gamma / ((gamma^2 - c*Q)*||p||)
    # with Q = alpha^2*x2 - 2*alpha*beta*s + beta^2*y2.
    t = 1.0 - two_c * s                                   # shared by alpha & gamma
    alpha = t + cy2
    gamma = jnp.maximum(t + cx2 * cy2, MIN_NORM)

    cq = alpha * (alpha * cx2 - two_c_beta * s) + beta2 * cy2
    denom = jnp.maximum(gamma * gamma - cq, MIN_NORM)     # > 0 for points in the ball
    num = (nb * s - alpha * nx) * gamma

    z = num * pl.reciprocal(denom, approx=True)           # EUP slot (free-ish)
    dist = _arsinh(z)
    if inv_sqrt_c != 1.0:
        dist = dist * inv_sqrt_c
    o_ref[...] = (dist + bias).astype(o_ref.dtype)


# ---------------------------------------------------------------------------
# Wrapper
# ---------------------------------------------------------------------------
def _round_up(n, m):
    return ((n + m - 1) // m) * m


def _vmem_budget_bytes():
    """Generation-aware (working-set budget, compiler vmem_limit) in bytes."""
    phys = 64 * 1024 * 1024
    try:
        info = pltpu.get_tpu_info()
        phys = int(getattr(info, "vmem_capacity_bytes", phys) or phys)
    except Exception:
        pass
    if phys >= 128 * 1024 * 1024:                 # v5e / v6e: 128 MiB per core
        return 96 * 1024 * 1024, 104 * 1024 * 1024
    return 48 * 1024 * 1024, 56 * 1024 * 1024     # v7x: 64 MiB physical -> headroom


def _vmem_bytes(tile_b, tile_p, d, x_isz, w_isz, o_isz):
    """Rough double-buffered working-set estimate for the chosen tiles."""
    x_in = 2 * tile_b * d * x_isz
    y_in = 2 * tile_b * 128 * 4                # (tile_b, 1) block padded to a lane
    w_in = 2 * d * tile_p * w_isz
    vec_in = 2 * 8 * tile_p * 4
    out = 2 * tile_b * tile_p * o_isz
    temps = 8 * tile_b * tile_p * 4            # live f32 epilogue temporaries
    return x_in + y_in + w_in + vec_in + out + temps


def distance2poincare_hyperplanes(x, points, bias=None, *, c=1.0,
                                  matmul_dtype=jnp.float32,
                                  out_dtype=jnp.float32,
                                  tile_b=None, tile_p=None):
    """x: (B, D) f32 on the ball, points: (P, D) f32, bias: (P,) f32 -> (B, P).

    matmul_dtype=bfloat16 trades boundary accuracy (<x,p> feeds the small
    denominator gamma near the ball boundary) for MXU throughput on v6e/v7x.
    """
    B, D = x.shape
    P = points.shape[0]
    if bias is None:
        bias = jnp.zeros((P,), jnp.float32)

    sqrt_c = float(c) ** 0.5
    x_isz = jnp.dtype(matmul_dtype).itemsize
    w_isz = x_isz
    o_isz = jnp.dtype(out_dtype).itemsize

    budget, limit_cap = _vmem_budget_bytes()

    # Tile selection: lane-dense plane tile (multiple of 128); big batch tile.
    if tile_p is None:
        tile_p = min(512, _round_up(P, 128))
    if tile_b is None:
        tile_b_cap = 1024 if budget >= 96 * 1024 * 1024 else 512
        tile_b = min(tile_b_cap, _round_up(B, 8))
    while _vmem_bytes(tile_b, tile_p, D, x_isz, w_isz, o_isz) > budget:
        if tile_b > 128:
            tile_b = _round_up(tile_b // 2, 8)
        elif tile_p > 128:
            tile_p = _round_up(tile_p // 2, 128)
        elif tile_b > 8:
            tile_b = _round_up(tile_b // 2, 8)
        else:
            # TODO(synk): K-tile plane_shape (D) with an f32 accumulator scratch
            # for extremely large D; not needed for realistic plane shapes.
            break

    B_pad = _round_up(B, tile_b)
    P_pad = _round_up(P, tile_p)
    # Guarantee >= 2 grid steps along a parallel axis so both v7x TensorCores
    # get work (harmless ~0.35us extra step on single-TC chips).
    if B_pad // tile_b == 1 and P_pad // tile_p == 1 and B > 8:
        tile_b = max(8, _round_up((B + 1) // 2, 8))
        B_pad = _round_up(B, tile_b)

    nb_tiles = B_pad // tile_b
    np_tiles = P_pad // tile_p

    # ---- host-side prep (cheap XLA ops, hoisted out of the kernel) ----
    x_f32 = x.astype(jnp.float32)
    cy2 = c * jnp.sum(x_f32 * x_f32, axis=-1, keepdims=True)       # (B, 1) f32
    x_mm = x_f32.astype(matmul_dtype)                              # single cast here
    if B_pad != B:
        x_mm = jnp.pad(x_mm, ((0, B_pad - B), (0, 0)))
        cy2 = jnp.pad(cy2, ((0, B_pad - B), (0, 0)))

    points_f32 = points.astype(jnp.float32)
    points_t = points_f32.T.astype(matmul_dtype)                   # (D, P) MXU layout
    p2 = jnp.sum(points_f32 * points_f32, axis=-1)                 # ||p||^2
    beta = 1.0 - c * p2
    a_norm = jnp.maximum(jnp.sqrt(p2), MIN_NORM)
    scale = (2.0 * sqrt_c) / a_norm
    pvec = jnp.stack([c * p2, beta * beta, 2.0 * c * beta,
                      p2 * scale, beta * scale,
                      bias.astype(jnp.float32)], axis=0)           # (6, P)
    pvec = jnp.pad(pvec, ((0, 2), (0, P_pad - P)))                 # -> (8, P_pad)
    if P_pad != P:
        points_t = jnp.pad(points_t, ((0, 0), (0, P_pad - P)))

    # Grid order: the operand whose block is invariant across the inner axis is
    # read from HBM only once; pick the order that minimizes total re-streaming.
    bytes_x = B_pad * D * x_isz
    bytes_w = D * P_pad * w_isz
    plane_outer = (np_tiles - 1) * bytes_x <= (nb_tiles - 1) * bytes_w
    if plane_outer:
        grid = (np_tiles, nb_tiles)
        x_map = lambda p, b: (b, 0)
        v_map = lambda p, b: (b, 0)
        w_map = lambda p, b: (0, p)
        c_map = lambda p, b: (0, p)
        o_map = lambda p, b: (b, p)
    else:
        grid = (nb_tiles, np_tiles)
        x_map = lambda b, p: (b, 0)
        v_map = lambda b, p: (b, 0)
        w_map = lambda b, p: (0, p)
        c_map = lambda b, p: (0, p)
        o_map = lambda b, p: (b, p)

    est_bytes = _vmem_bytes(tile_b, tile_p, D, x_isz, w_isz, o_isz)
    vmem_limit = int(min(limit_cap, max(32 * 1024 * 1024, int(1.5 * est_bytes))))

    cost = pl.CostEstimate(
        flops=2 * B_pad * P_pad * D + 30 * B_pad * P_pad,
        transcendentals=3 * B_pad * P_pad,
        bytes_accessed=((np_tiles if plane_outer else 1) * bytes_x
                        + (1 if plane_outer else nb_tiles) * bytes_w
                        + B_pad * P_pad * o_isz + B_pad * 4 + 8 * P_pad * 4),
    )

    kernel = functools.partial(_dist2plane_kernel,
                               two_c=2.0 * float(c),
                               inv_sqrt_c=1.0 / sqrt_c)
    out = pl.pallas_call(
        kernel,
        out_shape=jax.ShapeDtypeStruct((B_pad, P_pad), out_dtype),
        grid_spec=pltpu.PrefetchScalarGridSpec(
            num_scalar_prefetch=0,
            grid=grid,
            in_specs=[
                pl.BlockSpec((tile_b, D), x_map),      # x rows (matmul dtype)
                pl.BlockSpec((tile_b, 1), v_map),      # c*||x||^2
                pl.BlockSpec((D, tile_p), w_map),      # points^T block
                pl.BlockSpec((8, tile_p), c_map),      # per-plane constants + bias
            ],
            out_specs=pl.BlockSpec((tile_b, tile_p), o_map),
        ),
        compiler_params=pltpu.CompilerParams(
            dimension_semantics=("parallel", "parallel"),
            vmem_limit_bytes=vmem_limit),
        cost_estimate=cost,
    )(x_mm, cy2, points_t, pvec)

    return out[:B, :P]


# ---------------------------------------------------------------------------
# Pure-JAX reference (geoopt's formulation, same clamps) for validation.
# ---------------------------------------------------------------------------
def distance2poincare_hyperplanes_ref(x, points, bias, *, c=1.0,
                                      matmul_dtype=jnp.float32):
    sqrt_c = c ** 0.5
    s = jnp.dot(x.astype(matmul_dtype), points.astype(matmul_dtype).T,
                preferred_element_type=jnp.float32)
    x2 = jnp.sum(points * points, axis=-1)[None, :]
    y2 = jnp.sum(x * x, axis=-1, keepdims=True)
    alpha = 1.0 - 2.0 * c * s + c * y2
    beta = 1.0 - c * x2
    gamma = jnp.maximum(1.0 - 2.0 * c * s + (c * c) * x2 * y2, MIN_NORM)
    diff_norm2 = jnp.maximum(
        (alpha * alpha * x2 - 2.0 * alpha * beta * s + beta * beta * y2) / (gamma * gamma),
        MIN_NORM)
    sc_diff_a = (-alpha * x2 + beta * s) / gamma
    a_norm = jnp.maximum(jnp.sqrt(x2), MIN_NORM)
    num = 2.0 * sqrt_c * sc_diff_a
    denom = jnp.maximum((1.0 - c * diff_norm2) * a_norm, MIN_NORM)
    dist = _arsinh(num / denom) / sqrt_c
    return dist + bias[None, :]


# ---------------------------------------------------------------------------
# Deterministic parameter init (mirrors reset_parameters, synthetic weights).
# ---------------------------------------------------------------------------
def _expmap0(u, c=1.0):
    sqrt_c = c ** 0.5
    u_norm = jnp.maximum(jnp.linalg.norm(u, axis=-1, keepdims=True), MIN_NORM)
    return jnp.tanh(sqrt_c * u_norm) * u / (sqrt_c * u_norm)


def init_params(key, plane_shape, num_planes, std=1.0, c=1.0):
    k_dir, k_dist, k_bias = jax.random.split(key, 3)
    direction = jax.random.normal(k_dir, (num_planes, plane_shape), jnp.float32)
    direction = direction / jnp.linalg.norm(direction, axis=-1, keepdims=True)
    distance = jax.random.normal(k_dist, (num_planes,), jnp.float32) * std
    points = _expmap0(direction * distance[:, None], c=c)        # (P, D) on ball
    bias = jax.random.uniform(k_bias, (num_planes,), jnp.float32, -1.0, 1.0)
    return points, bias


if __name__ == "__main__":
    B, D, P = 16, 32, 16          # batch, plane_shape, num_planes
    c = 1.0

    key = jax.random.PRNGKey(0)
    k_params, k_x = jax.random.split(key)
    points, bias = init_params(k_params, plane_shape=D, num_planes=P, std=1.0, c=c)

    # Inputs must lie on the Poincare ball: map small tangent vectors via expmap0.
    x_tan = 0.3 * jax.random.normal(k_x, (B, D), jnp.float32)
    x = _expmap0(x_tan, c=c)

    # Default f32-matmul path, checked against the pure-JAX geoopt reference.
    out_f32 = jax.block_until_ready(
        distance2poincare_hyperplanes(x, points, bias, c=c, matmul_dtype=jnp.float32))
    ref_f32 = distance2poincare_hyperplanes_ref(x, points, bias, c=c,
                                                matmul_dtype=jnp.float32)
    assert out_f32.shape == (B, P) and out_f32.dtype == jnp.float32
    assert bool(jnp.all(jnp.isfinite(out_f32)))
    assert bool(jnp.allclose(out_f32, ref_f32, rtol=1e-2, atol=1e-2))

    # Optional bf16-MXU path (faster on v6e/v7x), checked against a bf16-matmul ref.
    out_bf16 = jax.block_until_ready(
        distance2poincare_hyperplanes(x, points, bias, c=c, matmul_dtype=jnp.bfloat16))
    ref_bf16 = distance2poincare_hyperplanes_ref(x, points, bias, c=c,
                                                 matmul_dtype=jnp.bfloat16)
    assert bool(jnp.all(jnp.isfinite(out_bf16)))
    assert bool(jnp.allclose(out_bf16, ref_bf16, rtol=1e-2, atol=1e-2))

    print("KERNEL_OK")
</pallas_src>

<mosaic_0001>
module attributes {stable_mosaic.version = 11 : i64} {
  func.func @_dist2plane_kernel(%arg0: i32, %arg1: i32, %arg2: memref<8x32xf32, #tpu.memory_space<vmem>>, %arg3: memref<8x1xf32, #tpu.memory_space<vmem>>, %arg4: memref<32x128xf32, #tpu.memory_space<vmem>>, %arg5: memref<8x128xf32, #tpu.memory_space<vmem>>, %arg6: memref<8x128xf32, #tpu.memory_space<vmem>>) attributes {dimension_semantics = [#tpu.dimension_semantics<parallel>, #tpu.dimension_semantics<parallel>], iteration_bounds = array<i64: 1, 2>, scalar_prefetch = 0 : i64, scratch_operands = 0 : i64, tpu.core_type = #tpu.core_type<tc>, window_params = [{transform_indices = @transform_0, window_bounds = array<i64: 8, 32>}, {transform_indices = @transform_1, window_bounds = array<i64: 8, 1>}, {transform_indices = @transform_2, window_bounds = array<i64: 32, 128>}, {transform_indices = @transform_3, window_bounds = array<i64: 8, 128>}, {transform_indices = @transform_4, window_bounds = array<i64: 8, 128>}]} {
    %c0 = arith.constant 0 : index
    %c0_0 = arith.constant 0 : index
    %0 = vector.load %arg2[%c0, %c0_0] : memref<8x32xf32, #tpu.memory_space<vmem>>, vector<8x32xf32>
    %c0_1 = arith.constant 0 : index
    %c0_2 = arith.constant 0 : index
    %1 = vector.load %arg4[%c0_1, %c0_2] : memref<32x128xf32, #tpu.memory_space<vmem>>, vector<32x128xf32>
    %cst = arith.constant dense<0.000000e+00> : vector<8x128xf32>
    %2 = tpu.matmul %0, %1, %cst {dimension_numbers = #tpu.dot_dimension_numbers<[1], [0], [0], [1], [0, 0, 1, 1], [], []>} : vector<8x32xf32>, vector<32x128xf32>, vector<8x128xf32> -> vector<8x128xf32>
    %c0_3 = arith.constant 0 : index
    %c0_4 = arith.constant 0 : index
    %3 = vector.load %arg3[%c0_3, %c0_4] : memref<8x1xf32, #tpu.memory_space<vmem>>, vector<8x1xf32>
    %c0_5 = arith.constant 0 : index
    %c0_6 = arith.constant 0 : index
    %4 = vector.load %arg5[%c0_5, %c0_6] : memref<8x128xf32, #tpu.memory_space<vmem>>, vector<1x128xf32>
    %c1 = arith.constant 1 : index
    %c0_7 = arith.constant 0 : index
    %5 = vector.load %arg5[%c1, %c0_7] : memref<8x128xf32, #tpu.memory_space<vmem>>, vector<1x128xf32>
    %c2 = arith.constant 2 : index
    %c0_8 = arith.constant 0 : index
    %6 = vector.load %arg5[%c2, %c0_8] : memref<8x128xf32, #tpu.memory_space<vmem>>, vector<1x128xf32>
    %c3 = arith.constant 3 : index
    %c0_9 = arith.constant 0 : index
    %7 = vector.load %arg5[%c3, %c0_9] : memref<8x128xf32, #tpu.memory_space<vmem>>, vector<1x128xf32>
    %c4 = arith.constant 4 : index
    %c0_10 = arith.constant 0 : index
    %8 = vector.load %arg5[%c4, %c0_10] : memref<8x128xf32, #tpu.memory_space<vmem>>, vector<1x128xf32>
    %c5 = arith.constant 5 : index
    %c0_11 = arith.constant 0 : index
    %9 = vector.load %arg5[%c5, %c0_11] : memref<8x128xf32, #tpu.memory_space<vmem>>, vector<1x128xf32>
    %cst_12 = arith.constant 2.000000e+00 : f32
    %10 = vector.broadcast %cst_12 : f32 to vector<8x128xf32>
    %11 = arith.mulf %10, %2 : vector<8x128xf32>
    %cst_13 = arith.constant 1.000000e+00 : f32
    %12 = vector.broadcast %cst_13 : f32 to vector<8x128xf32>
    %13 = arith.subf %12, %11 : vector<8x128xf32>
    %14 = vector.broadcast %3 : vector<8x1xf32> to vector<8x128xf32>
    %15 = arith.addf %13, %14 : vector<8x128xf32>
    %16 = vector.broadcast %4 : vector<1x128xf32> to vector<8x128xf32>
    %17 = vector.broadcast %3 : vector<8x1xf32> to vector<8x128xf32>
    %18 = arith.mulf %16, %17 : vector<8x128xf32>
    %19 = arith.addf %13, %18 : vector<8x128xf32>
    %cst_14 = arith.constant 1.000000e-15 : f32
    %20 = vector.broadcast %cst_14 : f32 to vector<8x128xf32>
    %21 = arith.maximumf %19, %20 : vector<8x128xf32>
    %22 = vector.broadcast %4 : vector<1x128xf32> to vector<8x128xf32>
    %23 = arith.mulf %15, %22 : vector<8x128xf32>
    %24 = vector.broadcast %6 : vector<1x128xf32> to vector<8x128xf32>
    %25 = arith.mulf %24, %2 : vector<8x128xf32>
    %26 = arith.subf %23, %25 : vector<8x128xf32>
    %27 = arith.mulf %15, %26 : vector<8x128xf32>
    %28 = vector.broadcast %5 : vector<1x128xf32> to vector<8x128xf32>
    %29 = vector.broadcast %3 : vector<8x1xf32> to vector<8x128xf32>
    %30 = arith.mulf %28, %29 : vector<8x128xf32>
    %31 = arith.addf %27, %30 : vector<8x128xf32>
    %32 = arith.mulf %21, %21 : vector<8x128xf32>
    %33 = arith.subf %32, %31 : vector<8x128xf32>
    %cst_15 = arith.constant 1.000000e-15 : f32
    %34 = vector.broadcast %cst_15 : f32 to vector<8x128xf32>
    %35 = arith.maximumf %33, %34 : vector<8x128xf32>
    %36 = vector.broadcast %8 : vector<1x128xf32> to vector<8x128xf32>
    %37 = arith.mulf %36, %2 : vector<8x128xf32>
    %38 = vector.broadcast %7 : vector<1x128xf32> to vector<8x128xf32>
    %39 = arith.mulf %15, %38 : vector<8x128xf32>
    %40 = arith.subf %37, %39 : vector<8x128xf32>
    %41 = arith.mulf %40, %21 : vector<8x128xf32>
    %42 = tpu.reciprocal %35 {approx = true} : vector<8x128xf32> -> vector<8x128xf32>
    %43 = arith.mulf %41, %42 : vector<8x128xf32>
    %44 = arith.mulf %43, %43 : vector<8x128xf32>
    %cst_16 = arith.constant 1.000000e+00 : f32
    %45 = vector.broadcast %cst_16 : f32 to vector<8x128xf32>
    %46 = arith.addf %45, %44 : vector<8x128xf32>
    %47 = math.sqrt %46 : vector<8x128xf32>
    %48 = arith.addf %43, %47 : vector<8x128xf32>
    %cst_17 = arith.constant 1.000000e-15 : f32
    %49 = vector.broadcast %cst_17 : f32 to vector<8x128xf32>
    %50 = arith.maximumf %48, %49 : vector<8x128xf32>
    %51 = math.log %50 : vector<8x128xf32>
    %52 = vector.broadcast %9 : vector<1x128xf32> to vector<8x128xf32>
    %53 = arith.addf %51, %52 : vector<8x128xf32>
    %c0_18 = arith.constant 0 : index
    %c0_19 = arith.constant 0 : index
    %54 = vector.load %arg6[%c0_18, %c0_19] : memref<8x128xf32, #tpu.memory_space<vmem>>, vector<8x128xf32>
    tpu.vector_store %arg6[%c0_18, %c0_19], %53 {strides = array<i32>} : memref<8x128xf32, #tpu.memory_space<vmem>>, vector<8x128xf32>,
    return
  }
  func.func @transform_0(%arg0: i32, %arg1: i32) -> (i32, i32) {
    %c0_i32 = arith.constant 0 : i32
    %c0_i32_0 = arith.constant 0 : i32
    return %arg1, %c0_i32 : i32, i32
  }
  func.func @transform_1(%arg0: i32, %arg1: i32) -> (i32, i32) {
    %c0_i32 = arith.constant 0 : i32
    %c0_i32_0 = arith.constant 0 : i32
    return %arg1, %c0_i32 : i32, i32
  }
  func.func @transform_2(%arg0: i32, %arg1: i32) -> (i32, i32) {
    %c0_i32 = arith.constant 0 : i32
    %c0_i32_0 = arith.constant 0 : i32
    return %c0_i32, %arg0 : i32, i32
  }
  func.func @transform_3(%arg0: i32, %arg1: i32) -> (i32, i32) {
    %c0_i32 = arith.constant 0 : i32
    %c0_i32_0 = arith.constant 0 : i32
    return %c0_i32, %arg0 : i32, i32
  }
  func.func @transform_4(%arg0: i32, %arg1: i32) -> (i32, i32) {
    %c0_i32 = arith.constant 0 : i32
    return %arg1, %arg0 : i32, i32
  }
}

</mosaic_0001>

<llo_original>
// kernel: tpu_custom_call.1
$region0: #{tpu_custom_call.1}
  #allocation0 [shape = 'u32[]', space=smem, size = 0x4, offset = 0x4, fixed_abs, tag = 'smem constant byte address 0x4 - core index']
  #allocation1 [shape = 'u32[72,128]{1,0:T(1,128)}', space=vmem, size = 0x9000, scoped, tag = 'internal scratch']
  %s0 = inlined_call_operand.vmem [shape: f32[16,32], index: 0, kind: input, shape index: {}]
  %s1 = inlined_call_operand.vmem [shape: f32[16,1], index: 1, kind: input, shape index: {}]
  %s2 = inlined_call_operand.hbm [shape: f32[32,128], index: 2, kind: input, shape index: {}]
  %s3 = inlined_call_operand.hbm [shape: f32[8,128], index: 3, kind: input, shape index: {}]
  %s4 = inlined_call_operand.hbm [shape: f32[16,128], index: 4, kind: output, shape index: {}]
  %s5 = sld [smem:[#allocation0]]
  $region57: #{tpu_custom_call.1} parent=0
    _
  %s7 = ssub.s32 1, %s5
  %s8 = scalar_select 0, %s7, %s5
  $region1: #{tpu_custom_call.1} parent=0
    #allocation2 [shape = 'u8[16384]{0}', space=vmem, size = 0x4000, scoped, tag = 'input window, operand 2, single buffered']
    #allocation3 [shape = 's32[2]{0}', space=sflag, size = 0x8, scoped, tag = 'scoped memory for tpu_custom_call.1']
    #allocation4 [shape = 's32[2]{0}', space=sflag, size = 0x8, scoped, tag = 'scoped memory for tpu_custom_call.1']
    #allocation5 [shape = 'u8[4096]{0}', space=vmem, size = 0x1000, scoped, tag = 'input window, operand 3, single buffered']
    #allocation6 [shape = 's32[1]{0}', space=sflag, size = 0x4, scoped, tag = 'scoped memory for tpu_custom_call.1']
    #allocation7 [shape = 'u8[8192]{0}', space=vmem, size = 0x2000, scoped, tag = 'output window, operand 0']
    %9 = vsyncpa [#allocation3], 0
    %10 = vsyncpa [#allocation6], 0
    %11 = vsyncpa [#allocation4], 0
    %s12 = scalar_lea.sflag [#allocation4], 1
    %13 = vsyncpa %s12, 0
    loop: start=0, step=1, limit=4
    $region2: #{tpu_custom_call.1} parent=1 // loop_pre_header
      _
    $region3: #{tpu_custom_call.1} parent=1 // loop_header
      %s15 = sphi 0, %s19
      %p16 = scmp.ge.s32.totalorder %s15, 4
      %s22 = sphi 0, %s34
      %s23 = sphi 0, %s30
      %s24 = sphi 0, %s22
      %s25 = sphi 0, %s23
      %s26 = sphi 0, %s24
      %s27 = sphi 0, %s25
      %s37 = sphi 0, %s39
      %s40 = sphi 0, %s37
      %s41 = sphi 0, %s40
      %s57 = sphi 0, %s41
      %s63 = sphi 0, %s65
      %s66 = sphi 0, %s63
      %s67 = sphi 0, %s66
      %s83 = sphi 0, %s67
      %s89 = sphi 0, %s91
      %s92 = sphi 0, %s89
      %s93 = sphi 0, %s92
      %s109 = sphi 0, %s93
      %s115 = sphi 0, %s117
      %s118 = sphi 0, %s115
      %s119 = sphi 0, %s118
      %s135 = sphi 0, %s119
      %s143 = sphi 0, %s145
      %s146 = sphi 0, %s143
      %s147 = sphi 0, %s146
      %s163 = sphi 0, %s147
    $region4: #{tpu_custom_call.1} parent=1 // loop_header_branch
      %18 = sbr.rel (%p16) target = $region8
    $region5: #{tpu_custom_call.1} parent=1 // loop_body
      %s20 = ssub.s32 %s15, 1
      %s21 = ssub.s32 %s15, 2
      %s28 = sadd.s32 1, %s23
      %p29 = scmp.ge.s32.totalorder %s28, 2
      %s30 = scalar_select %p29, 0, %s28
      %s31 = sadd.s32 1, %s22
      %s32 = scalar_select %p29, %s31, %s22
      %p33 = scmp.ge.s32.totalorder %s32, 1
      %s34 = scalar_select %p33, 0, %s32
      %s35 = ssub.s32 %s23, %s30
      %p36 = scmp.eq.s32.totalorder %s35, 0
      %s38 = sadd.s32 %s37, 1
      %s39 = scalar_select %p36, %s37, %s38
      %p42 = pneg %p36
      %p43 = scmp.eq.s32.totalorder %s15, 1
      %p44 = por %p42, %p43
      %p45 = scmp.ne.s32.totalorder %s37, %s40
      %p46 = scmp.eq.s32.totalorder %s15, 0
      %p47 = por %p45, %p46
      %p48 = scmp.ne.s32.totalorder %s37, %s40
      %p49 = scmp.eq.s32.totalorder %s20, 1
      %p50 = por %p48, %p49
      %p51 = scmp.ne.s32.totalorder %s40, %s41
      %p52 = scmp.eq.s32.totalorder %s20, 0
      %p53 = por %p51, %p52
      %p54 = scmp.ne.s32.totalorder %s40, %s41
      %p55 = scmp.eq.s32.totalorder %s21, 1
      %p56 = por %p54, %p55
      %p58 = scmp.ne.s32.totalorder %s41, %s57
      %p59 = scmp.eq.s32.totalorder %s21, 0
      %p60 = por %p58, %p59
      %s61 = ssub.s32 %s23, %s30
      %p62 = scmp.eq.s32.totalorder %s61, 0
      %s64 = sadd.s32 %s63, 1
      %s65 = scalar_select %p62, %s63, %s64
      %p68 = pneg %p62
      %p69 = scmp.eq.s32.totalorder %s15, 1
      %p70 = por %p68, %p69
      %p71 = scmp.ne.s32.totalorder %s63, %s66
      %p72 = scmp.eq.s32.totalorder %s15, 0
      %p73 = por %p71, %p72
      %p74 = scmp.ne.s32.totalorder %s63, %s66
      %p75 = scmp.eq.s32.totalorder %s20, 1
      %p76 = por %p74, %p75
      %p77 = scmp.ne.s32.totalorder %s66, %s67
      %p78 = scmp.eq.s32.totalorder %s20, 0
      %p79 = por %p77, %p78
      %p80 = scmp.ne.s32.totalorder %s66, %s67
      %p81 = scmp.eq.s32.totalorder %s21, 1
      %p82 = por %p80, %p81
      %p84 = scmp.ne.s32.totalorder %s67, %s83
      %p85 = scmp.eq.s32.totalorder %s21, 0
      %p86 = por %p84, %p85
      %s87 = ssub.s32 %s22, %s34
      %p88 = scmp.eq.s32.totalorder %s87, 0
      %s90 = sadd.s32 %s89, 1
      %s91 = scalar_select %p88, %s89, %s90
      %p94 = pneg %p88
      %p95 = scmp.eq.s32.totalorder %s15, 1
      %p96 = por %p94, %p95
      %p97 = scmp.ne.s32.totalorder %s89, %s92
      %p98 = scmp.eq.s32.totalorder %s15, 0
      %p99 = por %p97, %p98
      %p100 = scmp.ne.s32.totalorder %s89, %s92
      %p101 = scmp.eq.s32.totalorder %s20, 1
      %p102 = por %p100, %p101
      %p103 = scmp.ne.s32.totalorder %s92, %s93
      %p104 = scmp.eq.s32.totalorder %s20, 0
      %p105 = por %p103, %p104
      %p106 = scmp.ne.s32.totalorder %s92, %s93
      %p107 = scmp.eq.s32.totalorder %s21, 1
      %p108 = por %p106, %p107
      %p110 = scmp.ne.s32.totalorder %s93, %s109
      %p111 = scmp.eq.s32.totalorder %s21, 0
      %p112 = por %p110, %p111
      %s113 = ssub.s32 %s22, %s34
      %p114 = scmp.eq.s32.totalorder %s113, 0
      %s116 = sadd.s32 %s115, 1
      %s117 = scalar_select %p114, %s115, %s116
      %p120 = pneg %p114
      %p121 = scmp.eq.s32.totalorder %s15, 1
      %p122 = por %p120, %p121
      %p123 = scmp.ne.s32.totalorder %s115, %s118
      %p124 = scmp.eq.s32.totalorder %s15, 0
      %p125 = por %p123, %p124
      %p126 = scmp.ne.s32.totalorder %s115, %s118
      %p127 = scmp.eq.s32.totalorder %s20, 1
      %p128 = por %p126, %p127
      %p129 = scmp.ne.s32.totalorder %s118, %s119
      %p130 = scmp.eq.s32.totalorder %s20, 0
      %p131 = por %p129, %p130
      %p132 = scmp.ne.s32.totalorder %s118, %s119
      %p133 = scmp.eq.s32.totalorder %s21, 1
      %p134 = por %p132, %p133
      %p136 = scmp.ne.s32.totalorder %s119, %s135
      %p137 = scmp.eq.s32.totalorder %s21, 0
      %p138 = por %p136, %p137
      %s139 = ssub.s32 %s23, %s30
      %s140 = ssub.s32 %s22, %s34
      %s141 = sor.u32 %s139, %s140
      %p142 = scmp.eq.s32.totalorder %s141, 0
      %s144 = sadd.s32 %s143, 1
      %s145 = scalar_select %p142, %s143, %s144
      %p148 = pneg %p142
      %p149 = scmp.eq.s32.totalorder %s15, 1
      %p150 = por %p148, %p149
      %p151 = scmp.ne.s32.totalorder %s143, %s146
      %p152 = scmp.eq.s32.totalorder %s15, 0
      %p153 = por %p151, %p152
      %p154 = scmp.ne.s32.totalorder %s143, %s146
      %p155 = scmp.eq.s32.totalorder %s20, 1
      %p156 = por %p154, %p155
      %p157 = scmp.ne.s32.totalorder %s146, %s147
      %p158 = scmp.eq.s32.totalorder %s20, 0
      %p159 = por %p157, %p158
      %p160 = scmp.ne.s32.totalorder %s146, %s147
      %p161 = scmp.eq.s32.totalorder %s21, 1
      %p162 = por %p160, %p161
      %p164 = scmp.ne.s32.totalorder %s147, %s163
      %p165 = scmp.eq.s32.totalorder %s21, 0
      %p166 = por %p164, %p165
      %p167 = scmp.le.s32.totalorder 1, %s15
      %p168 = scmp.lt.s32.totalorder %s15, 3
      %p169 = pnand %p167, %p168
      %p170 = pneg %p169
      // Predicated region
      $region9: #{tpu_custom_call.1} parent=5 // pred_check
        _
      $region10: #{tpu_custom_call.1} parent=5 // pred_check_branch
        %172 = sbr.rel (%p169) target = $region12
      $region11: #{tpu_custom_call.1} parent=5 // pred_region
        %s173 = ssub.s32 %s15, 1
        // Predicated region
        $region13: #{tpu_custom_call.1} parent=11 // pred_check
          %p174 = pneg %p105
        $region14: #{tpu_custom_call.1} parent=11 // pred_check_branch
          %176 = sbr.rel (%p174) target = $region16
        $region15: #{tpu_custom_call.1} parent=11 // pred_region
          %178 = vsyncadd [#allocation3], 0
          %s179 = smul.addr %s24, 8
          %s180 = scalar_lea.hbm %s2, %s179
          %s181 = sshll.u32 %s180, 4
          %s182 = int_to_ptr.hbm [resolvable:$true] %s181
          %s183 = sshll.u32 [#allocation2], 4
          %s184 = int_to_ptr.vmem [resolvable:$true] %s183
          %189 = dma.hbm_to_vmem [thread:$0]  %s182, 512, %s184, [#allocation3], 128, 128, 8
        $region16: #{tpu_custom_call.1} parent=11 // pred_fallthru
          _
        // Predicated region
        $region17: #{tpu_custom_call.1} parent=11 // pred_check
          %p190 = pneg %p131
        $region18: #{tpu_custom_call.1} parent=11 // pred_check_branch
          %192 = sbr.rel (%p190) target = $region20
        $region19: #{tpu_custom_call.1} parent=11 // pred_region
          %194 = vsyncadd [#allocation6], 0
          %s195 = smul.addr %s24, 8
          %s196 = scalar_lea.hbm %s3, %s195
          %s198 = sshll.u32 %s196, 4
          %s199 = int_to_ptr.hbm [resolvable:$true] %s198
          %s200 = sshll.u32 [#allocation5], 4
          %s201 = int_to_ptr.vmem [resolvable:$true] %s200
          %203 = dma.hbm_to_vmem [thread:$0]  %s199, 128, %s201, [#allocation6]
        $region20: #{tpu_custom_call.1} parent=11 // pred_fallthru
          _
      $region12: #{tpu_custom_call.1} parent=5 // pred_fallthru
        _
      %p204 = scmp.lt.s32.totalorder %s15, 2
      // Predicated region
      $region21: #{tpu_custom_call.1} parent=5 // pred_check
        %p205 = pneg %p204
      $region22: #{tpu_custom_call.1} parent=5 // pred_check_branch
        %207 = sbr.rel (%p205) target = $region24
      $region23: #{tpu_custom_call.1} parent=5 // pred_region
        // Predicated region
        $region25: #{tpu_custom_call.1} parent=23 // pred_check
          %p208 = pneg %p47
        $region26: #{tpu_custom_call.1} parent=23 // pred_check_branch
          %210 = sbr.rel (%p208) target = $region28
        $region27: #{tpu_custom_call.1} parent=23 // pred_region
          %p211 = scmp.lt.s32.totalorder %s23, 1
          %s212 = scalar_select %p211, %s23, 1
          %s213 = smul.addr %s212, 8
          %s214 = scalar_lea.vmem %s0, %s213
        $region28: #{tpu_custom_call.1} parent=23 // pred_fallthru
          _
        // Predicated region
        $region29: #{tpu_custom_call.1} parent=23 // pred_check
          %p215 = pneg %p73
        $region30: #{tpu_custom_call.1} parent=23 // pred_check_branch
          %217 = sbr.rel (%p215) target = $region32
        $region31: #{tpu_custom_call.1} parent=23 // pred_region
          %p218 = scmp.lt.s32.totalorder %s23, 1
          %s219 = scalar_select %p218, %s23, 1
          %s220 = smul.addr %s219, 8
          %s221 = scalar_lea.vmem %s1, %s220
        $region32: #{tpu_custom_call.1} parent=23 // pred_fallthru
          _
      $region24: #{tpu_custom_call.1} parent=5 // pred_fallthru
        _
      %p222 = scmp.le.s32.totalorder 1, %s15
      %p223 = scmp.lt.s32.totalorder %s15, 3
      %p224 = pnand %p222, %p223
      %p225 = pneg %p224
      // Predicated region
      $region33: #{tpu_custom_call.1} parent=5 // pred_check
        _
      $region34: #{tpu_custom_call.1} parent=5 // pred_check_branch
        %227 = sbr.rel (%p224) target = $region36
      $region35: #{tpu_custom_call.1} parent=5 // pred_region
        %s228 = ssub.s32 %s15, 1
        // Predicated region
        $region37: #{tpu_custom_call.1} parent=35 // pred_check
          %p229 = pneg %p105
        $region38: #{tpu_custom_call.1} parent=35 // pred_check_branch
          %231 = sbr.rel (%p229) target = $region40
        $region39: #{tpu_custom_call.1} parent=35 // pred_region
          %233 = dma.done [#allocation3], 512
        $region40: #{tpu_custom_call.1} parent=35 // pred_fallthru
          _
        // Predicated region
        $region41: #{tpu_custom_call.1} parent=35 // pred_check
          %p234 = pneg %p131
        $region42: #{tpu_custom_call.1} parent=35 // pred_check_branch
          %236 = sbr.rel (%p234) target = $region44
        $region43: #{tpu_custom_call.1} parent=35 // pred_region
          %238 = dma.done [#allocation6], 128
        $region44: #{tpu_custom_call.1} parent=35 // pred_fallthru
          _
        %p239 = scmp.lt.s32.totalorder %s25, 1
        %s240 = scalar_select %p239, %s25, 1
        %s241 = smul.addr %s240, 8
        %s242 = scalar_lea.vmem %s0, %s241
        %p243 = pneg %p53
        %p244 = pneg %p50
        %p245 = scmp.lt.s32.totalorder %s25, 1
        %s246 = scalar_select %p245, %s25, 1
        %s247 = smul.addr %s246, 8
        %s248 = scalar_lea.vmem %s1, %s247
        %p249 = pneg %p79
        %p250 = pneg %p76
        %p251 = pneg %p105
        %p252 = pneg %p102
        %p253 = pneg %p131
        %p254 = pneg %p128
        %p255 = pneg %p159
        %p256 = pneg %p156
        %s257 = sand.u32 %s146, 1
        %s258 = scalar_lea.sflag [#allocation4], %s257
        %s259 = sand.u32 %s146, 1
        %s260 = smul.addr %s259, 8
        %s261 = scalar_lea.vmem [#allocation7], %s260
        %p262 = scmp.lt.s32.totalorder %s25, 1
        %s263 = scalar_select %p262, %s25, 1
        %s264 = smul.addr %s263, 8
        %s265 = scalar_lea.vmem %s0, %s264
        %p266 = scmp.lt.s32.totalorder %s25, 1
        %s267 = scalar_select %p266, %s25, 1
        %s268 = smul.addr %s267, 8
        %s269 = scalar_lea.vmem %s1, %s268
        %v270 = vld [vmem:[%s265] sm:$0xff]
        %v271 = vld [vmem:[#allocation2] sm:$0xff]
        %v272 = vld [vmem:[#allocation2 + $0x8] sm:$0xff]
        %v273 = vld [vmem:[#allocation2 + $0x10] sm:$0xff]
        %v274 = vld [vmem:[#allocation2 + $0x18] sm:$0xff]
        %vm275 = vcmask 261120
        %v277 = vsel %vm275, %v270, 0
        %279 = vmatpush.msra.mxu0 0.0
        %280 = vmatpush.msra.mxu0 0.0
        %281 = vmatpush.msra.mxu0 0.0
        %282 = vmatpush.msra.mxu0 0.0
        %283 = vmatpush.msra.mxu0 0.0
        %284 = vmatpush.msra.mxu0 0.0
        %285 = vmatpush.msra.mxu0 0.0
        %286 = vmatpush.msra.mxu0 0.0
        %287 = vmatpush.msra.mxu0 0.0
        %288 = vmatpush.msra.mxu0 0.0
        %289 = vmatpush.msra.mxu0 0.0
        %290 = vmatpush.msra.mxu0 0.0
        %291 = vmatpush.msra.mxu0 %v274
        %292 = vmatpush.msra.mxu0 %v273
        %293 = vmatpush.msra.mxu0 %v272
        %294 = vmatpush.msra.mxu0 %v271
        %295 = vmatmul.f32.gmra.mxu0 %v277
        %v296 = vpop.f32.mrf.mxu0
        %v297 = vadd.f32 0.0, %v296
        %298 = vdwg.mxu0
        %v299 = vld [vmem:[%s269] sm:$0xff]
        %v300 = vld [vmem:[#allocation5] sm:$0x1]
        %v301 = vld [vmem:[#allocation5 + $0x1] sm:$0x1]
        %v302 = vld [vmem:[#allocation5 + $0x2] sm:$0x1]
        %v303 = vld [vmem:[#allocation5 + $0x3] sm:$0x1]
        %v304 = vld [vmem:[#allocation5 + $0x4] sm:$0x1]
        %v305 = vld [vmem:[#allocation5 + $0x5] sm:$0x1]
        %v306 = vmul.f32 %v297, 2.0
        %v307 = vsub.f32 1.0, %v306
        %309 = vset.pattern.permute.xlu0 0
        %310 = vperm.xlu0 %309, %v299
        %v311 = vpop.permute.xlu0 %310
        %v313 = vadd.f32 %v307, %v311
        %v314 = vperm.slane %v300, 0
        %v315 = vmul.f32 %v314, %v311
        %v316 = vadd.f32 %v307, %v315
        %v317 = vmax.f32 %v316, 1e-15
        %v318 = vmul.f32 %v313, %v314
        %v319 = vperm.slane %v302, 0
        %v320 = vmul.f32 %v319, %v297
        %v321 = vsub.f32 %v318, %v320
        %v322 = vmul.f32 %v313, %v321
        %v323 = vperm.slane %v301, 0
        %v324 = vmul.f32 %v323, %v311
        %v325 = vadd.f32 %v322, %v324
        %v326 = vmul.f32 %v317, %v317
        %v327 = vsub.f32 %v326, %v325
        %v328 = vmax.f32 %v327, 1e-15
        %v329 = vperm.slane %v304, 0
        %v330 = vmul.f32 %v329, %v297
        %v331 = vperm.slane %v303, 0
        %v332 = vmul.f32 %v313, %v331
        %v333 = vsub.f32 %v330, %v332
        %v334 = vmul.f32 %v333, %v317
        %v335 = vrcp.pop %v328
        %v336 = vmul.f32 %v334, %v335
        %v337 = vmul.f32 %v336, %v336
        %v338 = vadd.f32 %v337, 1.0
        %v339 = vrsqrt.pop %v338
        %v340 = vmul.f32 %v339, %v338
        %v341 = vmul.f32 %v340, %v339
        %v342 = vmul.f32 0.5, %v341
        %v343 = vsub.f32 1.5, %v342
        %v344 = vmul.f32 %v339, %v343
        %v345 = vmul.f32 %v338, %v344
        %vm346 = vcmp.eq.f32.partialorder %v338, inf
        %v347 = vsel %vm346, %v338, %v345
        %vm348 = vcmp.eq.f32.partialorder %v338, 0.0
        %v349 = vand.u32 %v338, 2147483648
        %v350 = vsel %vm348, %v349, %v347
        %v351 = vadd.f32 %v336, %v350
        %v352 = vmax.f32 %v351, 1e-15
        %v353 = vlog2.pop %v352
        %v354 = vmul.f32 %v353, 0.6931472
        %v355 = vperm.slane %v305, 0
        %v356 = vadd.f32 %v354, %v355
        %357 = vst [vmem:[%s261] sm:$0xff] %v356
        %s358 = sand.u32 %s146, 1
        %s359 = scalar_lea.sflag [#allocation4], %s358
        %s360 = sand.u32 %s146, 1
        %s361 = smul.addr %s360, 8
        %s362 = scalar_lea.vmem [#allocation7], %s361
        // Predicated region
        $region45: #{tpu_custom_call.1} parent=35 // pred_check
          %p363 = pneg %p156
        $region46: #{tpu_custom_call.1} parent=35 // pred_check_branch
          %365 = sbr.rel (%p363) target = $region48
        $region47: #{tpu_custom_call.1} parent=35 // pred_region
          %367 = vsyncadd %s359, 0
          %s368 = sadd.s32 %s24, %s25
          %s369 = smul.addr %s368, 8
          %s370 = scalar_lea.hbm %s4, %s369
          %s372 = sshll.u32 %s362, 4
          %s373 = int_to_ptr.vmem [resolvable:$true] %s372
          %s374 = sshll.u32 %s370, 4
          %s375 = int_to_ptr.hbm [resolvable:$true] %s374
          %377 = dma.vmem_to_hbm [thread:$0]  %s373, 128, %s375, %s359
        $region48: #{tpu_custom_call.1} parent=35 // pred_fallthru
          _
      $region36: #{tpu_custom_call.1} parent=5 // pred_fallthru
        _
      %p378 = scmp.le.s32.totalorder 2, %s15
      // Predicated region
      $region49: #{tpu_custom_call.1} parent=5 // pred_check
        %p379 = pneg %p378
      $region50: #{tpu_custom_call.1} parent=5 // pred_check_branch
        %381 = sbr.rel (%p379) target = $region52
      $region51: #{tpu_custom_call.1} parent=5 // pred_region
        %s382 = ssub.s32 %s15, 2
        // Predicated region
        $region53: #{tpu_custom_call.1} parent=51 // pred_check
          %p383 = pneg %p162
        $region54: #{tpu_custom_call.1} parent=51 // pred_check_branch
          %385 = sbr.rel (%p383) target = $region56
        $region55: #{tpu_custom_call.1} parent=51 // pred_region
          %s386 = sand.u32 %s147, 1
          %s387 = scalar_lea.sflag [#allocation4], %s386
          %s388 = sand.u32 %s147, 1
          %s389 = smul.addr %s388, 8
          %s390 = scalar_lea.vmem [#allocation7], %s389
          %392 = dma.done %s387, 128
        $region56: #{tpu_custom_call.1} parent=51 // pred_fallthru
          _
      $region52: #{tpu_custom_call.1} parent=5 // pred_fallthru
        _
    $region6: #{tpu_custom_call.1} parent=1 // loop_footer
      %s19 = sadd.s32 1, %s15
    $region7: #{tpu_custom_call.1} parent=1 // loop_footer_branch
      %14 = sbr.rel target = $region3
    $region8: #{tpu_custom_call.1} parent=1 // loop_exit
      _
    %393 = vsyncpa [#allocation3], 1
    %s394 = scalar_lea.sflag [#allocation3], 1
    %395 = vsyncpa %s394, 1
    %396 = vsyncpa [#allocation6], 1
    %397 = vsyncpa [#allocation4], 1
    %s398 = scalar_lea.sflag [#allocation4], 1
    %399 = vsyncpa %s398, 1

</llo_original>
